<compile_context>
chip_gen: v7x
topology: tpu7x:2x2x1
jax: 0.10.0
libtpu: 0.0.40
codegen_flags: <defaults>
</compile_context>

<pallas_src>
import functools

import numpy as np
import jax
import jax.numpy as jnp
from jax.experimental import pallas as pl
from jax.experimental.pallas import tpu as pltpu


# ----------------------------------------------------------------------------
# proj_dec Linear (M-tiled)
# ----------------------------------------------------------------------------
def _linear_kernel(x_ref, w_ref, b_ref, o_ref):
    o_ref[...] = (
        jnp.dot(x_ref[...], w_ref[...], preferred_element_type=jnp.float32)
        + b_ref[...]
    )


def linear_pallas(x, w, b, *, tile_m=512):
    """y = x @ w + b, tiled over rows (used for proj_dec)."""
    M, K = x.shape
    N = w.shape[1]
    tm = min(tile_m, M)
    return pl.pallas_call(
        _linear_kernel,
        out_shape=jax.ShapeDtypeStruct((M, N), jnp.float32),
        grid=(pl.cdiv(M, tm),),
        in_specs=[
            pl.BlockSpec((tm, K), lambda i: (i, 0)),
            pl.BlockSpec((K, N), lambda i: (0, 0)),
            pl.BlockSpec((1, N), lambda i: (0, 0)),
        ],
        out_specs=pl.BlockSpec((tm, N), lambda i: (i, 0)),
        compiler_params=pltpu.CompilerParams(dimension_semantics=("parallel",)),
    )(x, w, b.reshape(1, N))


# ----------------------------------------------------------------------------
# Fused ConvNeXt block: dwconv7x7 + LN + MLP + layer scale + residual (+ final 1x1 conv)
# ----------------------------------------------------------------------------
def _fused_block_kernel(*refs, W, with_final):
    if with_final:
        (x_ref, dww_ref, dwb_ref, lnw_ref, lnb_ref,
         w1t_ref, b1_ref, w2t_ref, b2_ref, g_ref,
         fwt_ref, fb_ref, o_ref, xp_ref) = refs
    else:
        (x_ref, dww_ref, dwb_ref, lnw_ref, lnb_ref,
         w1t_ref, b1_ref, w2t_ref, b2_ref, g_ref,
         o_ref, xp_ref) = refs

    C, HW = x_ref.shape
    halo = 3 * W + 3              # top/bottom zero margin of the flat padded slab
    band_len = HW + 6 * W

    # Zero ONLY the halo strips (interior is fully overwritten below).  Done every step:
    # under megacore "parallel" each core owns its scratch, so no program_id gating.
    xp_ref[:, :halo] = jnp.zeros((C, halo), jnp.float32)
    xp_ref[:, halo + HW:halo + HW + halo] = jnp.zeros((C, halo), jnp.float32)
    xp_ref[:, halo:halo + HW] = x_ref[...]

    # 7x7 depthwise conv on the flat slab.  Output pixel f = h*W + w; tap (dh, dj) reads
    # padded index halo + f + dh*W + dj.  Row wrap-around along W is killed by a per-dj
    # column mask (equivalent to zero padding).  One lane-shifted band per dj (7 total),
    # the dh offsets are W-strided slices of it.
    col = jax.lax.broadcasted_iota(jnp.int32, (1, band_len), 1) % W
    acc = jnp.zeros((C, HW), jnp.float32)
    for dj in range(-3, 4):
        mask = jnp.logical_and(col + dj >= 0, col + dj < W)
        band = jnp.where(mask, xp_ref[:, 3 + dj:3 + dj + band_len], 0.0)
        for dh in range(-3, 4):
            tap = (3 + dh) * 7 + (3 + dj)
            acc = acc + band[:, (3 + dh) * W:(3 + dh) * W + HW] * dww_ref[:, tap:tap + 1]
    y = acc + dwb_ref[...]

    # LayerNorm over channels (sublane axis; biased variance, eps=1e-6)
    mean = jnp.mean(y, axis=0, keepdims=True)
    var = jnp.mean(jnp.square(y - mean), axis=0, keepdims=True)
    y = (y - mean) * jax.lax.rsqrt(var + 1e-6)
    y = y * lnw_ref[...] + lnb_ref[...]

    # Pointwise MLP on the MXU (transposed: weights @ activations, lane-dense)
    h = jnp.dot(w1t_ref[...], y, preferred_element_type=jnp.float32) + b1_ref[...]
    h = jax.nn.gelu(h, approximate=False)          # exact erf GELU, like nn.GELU()
    z = jnp.dot(w2t_ref[...], h, preferred_element_type=jnp.float32) + b2_ref[...]
    out = x_ref[...] + g_ref[...] * z              # layer scale + residual (drop_path=0)

    if with_final:
        # fused final 1x1 conv: logits = final_w^T @ out + final_b (lane-dense output)
        o_ref[...] = (jnp.dot(fwt_ref[...], out, preferred_element_type=jnp.float32)
                      + fb_ref[...])
    else:
        o_ref[...] = out


def fused_block_pallas(x, blk, W, *, final_w=None, final_b=None):
    """One fused ConvNeXt block, grid over batch.  x: (B, C, H*W), W = feature-map width.
    If final_w/final_b are given, the 1x1 final conv is fused and the output becomes
    (B, num_classes, H*W) instead of (B, C, H*W)."""
    B, C, HW = x.shape
    C4 = 4 * C
    halo = 3 * W + 3
    with_final = final_w is not None

    dww = blk['dw_w'].reshape(49, C).T                     # (C, 49), tap index = ki*7+kj
    args = [x, dww,
            blk['dw_b'].reshape(C, 1), blk['ln_w'].reshape(C, 1), blk['ln_b'].reshape(C, 1),
            blk['pw1_w'].T, blk['pw1_b'].reshape(C4, 1),
            blk['pw2_w'].T, blk['pw2_b'].reshape(C, 1),
            blk['gamma'].reshape(C, 1)]
    in_specs = [
        pl.BlockSpec((None, C, HW), lambda b: (b, 0, 0)),
        pl.BlockSpec((C, 49), lambda b: (0, 0)),
        pl.BlockSpec((C, 1), lambda b: (0, 0)),
        pl.BlockSpec((C, 1), lambda b: (0, 0)),
        pl.BlockSpec((C, 1), lambda b: (0, 0)),
        pl.BlockSpec((C4, C), lambda b: (0, 0)),
        pl.BlockSpec((C4, 1), lambda b: (0, 0)),
        pl.BlockSpec((C, C4), lambda b: (0, 0)),
        pl.BlockSpec((C, 1), lambda b: (0, 0)),
        pl.BlockSpec((C, 1), lambda b: (0, 0)),
    ]
    if with_final:
        ncls = final_w.shape[1]
        args += [final_w.T, final_b.reshape(ncls, 1)]
        in_specs += [pl.BlockSpec((ncls, C), lambda b: (0, 0)),
                     pl.BlockSpec((ncls, 1), lambda b: (0, 0))]
        out_c = ncls
    else:
        out_c = C

    return pl.pallas_call(
        functools.partial(_fused_block_kernel, W=W, with_final=with_final),
        out_shape=jax.ShapeDtypeStruct((B, out_c, HW), jnp.float32),
        grid=(B,),
        in_specs=in_specs,
        out_specs=pl.BlockSpec((None, out_c, HW), lambda b: (b, 0, 0)),
        scratch_shapes=[pltpu.VMEM((C, HW + 2 * halo), jnp.float32)],
        compiler_params=pltpu.CompilerParams(dimension_semantics=("parallel",)),
    )(*args)


# ----------------------------------------------------------------------------
# Standalone 1x1 conv (only used if depth == 0)
# ----------------------------------------------------------------------------
def _pointwise_conv_kernel(x_ref, w_ref, b_ref, o_ref):
    o_ref[...] = (jnp.dot(w_ref[...], x_ref[...], preferred_element_type=jnp.float32)
                  + b_ref[...])


def pointwise_conv_pallas(x, w_t, b):
    """x: (B, C, HW), w_t: (ncls, C) -> (B, ncls, HW)."""
    B, C, HW = x.shape
    ncls = w_t.shape[0]
    return pl.pallas_call(
        _pointwise_conv_kernel,
        out_shape=jax.ShapeDtypeStruct((B, ncls, HW), jnp.float32),
        grid=(B,),
        in_specs=[pl.BlockSpec((None, C, HW), lambda b: (b, 0, 0)),
                  pl.BlockSpec((ncls, C), lambda b: (0, 0)),
                  pl.BlockSpec((ncls, 1), lambda b: (0, 0))],
        out_specs=pl.BlockSpec((None, ncls, HW), lambda b: (b, 0, 0)),
        compiler_params=pltpu.CompilerParams(dimension_semantics=("parallel",)),
    )(x, w_t, b.reshape(ncls, 1))


# ----------------------------------------------------------------------------
# Bilinear upsample (align_corners=False): Wy @ X @ Wx^T, P planes per grid step
# ----------------------------------------------------------------------------
def _bilinear_kernel(x_ref, wy_ref, wxt_ref, o_ref):
    P, h, w = x_ref.shape
    Wo = wxt_ref.shape[1]
    # stage 1 fused across planes: (P*h, w) @ (w, Wo) -> full-width MXU matmul
    t1 = jnp.dot(x_ref[...].reshape(P * h, w), wxt_ref[...],
                 preferred_element_type=jnp.float32).reshape(P, h, Wo)
    # stage 2: per plane (H_out, h) @ (h, Wo)
    for p in range(P):
        o_ref[p] = jnp.dot(wy_ref[...], t1[p], preferred_element_type=jnp.float32)


def _interp_matrix(out_size, in_size):
    """Row-stochastic matrix implementing 1-D linear interpolation
    (matches F.interpolate(mode='bilinear', align_corners=False))."""
    scale = in_size / out_size
    dst = np.arange(out_size, dtype=np.float64)
    src = np.maximum((dst + 0.5) * scale - 0.5, 0.0)
    i0 = np.minimum(np.floor(src).astype(np.int64), in_size - 1)
    i1 = np.minimum(i0 + 1, in_size - 1)
    frac = (src - i0).astype(np.float32)
    M = np.zeros((out_size, in_size), dtype=np.float32)
    M[np.arange(out_size), i0] += (1.0 - frac)
    M[np.arange(out_size), i1] += frac
    return M


def bilinear_resize_pallas(x, out_h, out_w, *, planes_per_step=8):
    """x: (N, h, w) -> (N, out_h, out_w).  planes_per_step kept <= 8 (v7x 64MiB VMEM)."""
    N, h, w = x.shape
    P = min(planes_per_step, N)
    wy = jnp.asarray(_interp_matrix(out_h, h))        # (out_h, h)
    wxt = jnp.asarray(_interp_matrix(out_w, w).T)     # (w, out_w)
    return pl.pallas_call(
        _bilinear_kernel,
        out_shape=jax.ShapeDtypeStruct((N, out_h, out_w), jnp.float32),
        grid=(pl.cdiv(N, P),),
        in_specs=[
            pl.BlockSpec((P, h, w), lambda i: (i, 0, 0)),
            pl.BlockSpec((out_h, h), lambda i: (0, 0)),
            pl.BlockSpec((w, out_w), lambda i: (0, 0)),
        ],
        out_specs=pl.BlockSpec((P, out_h, out_w), lambda i: (i, 0, 0)),
        compiler_params=pltpu.CompilerParams(dimension_semantics=("parallel",)),
    )(x, wy, wxt)


# ----------------------------------------------------------------------------
# Parameters (deterministic synthetic init; shapes follow the PyTorch module)
# ----------------------------------------------------------------------------
def init_params(key, dim_tokens_enc, embed_dim, preds_per_patch, num_classes, depth):
    C = embed_dim // preds_per_patch
    ks = iter(jax.random.split(key, 2 + 3 * depth))
    params = {
        'proj_w': 0.02 * jax.random.normal(next(ks), (dim_tokens_enc, embed_dim), jnp.float32),
        'proj_b': jnp.zeros((embed_dim,), jnp.float32),
        'blocks': [],
        'final_w': 0.02 * jax.random.normal(next(ks), (C, num_classes), jnp.float32),
        'final_b': jnp.zeros((num_classes,), jnp.float32),
    }
    for _ in range(depth):
        params['blocks'].append({
            'dw_w': 0.05 * jax.random.normal(next(ks), (7, 7, C), jnp.float32),
            'dw_b': jnp.zeros((C,), jnp.float32),
            'ln_w': jnp.ones((C,), jnp.float32),
            'ln_b': jnp.zeros((C,), jnp.float32),
            'pw1_w': 0.02 * jax.random.normal(next(ks), (C, 4 * C), jnp.float32),
            'pw1_b': jnp.zeros((4 * C,), jnp.float32),
            'pw2_w': 0.02 * jax.random.normal(next(ks), (4 * C, C), jnp.float32),
            'pw2_b': jnp.zeros((C,), jnp.float32),
            'gamma': jnp.full((C,), 1e-6, jnp.float32),   # layer_scale_init_value
        })
    return params


# ----------------------------------------------------------------------------
# Forward (wrapper = layout glue; compute = Pallas kernels)
# ----------------------------------------------------------------------------
def convnext_adapter_forward(encoder_tokens, input_info, params, *,
                             patch_size=16, preds_per_patch=16, embed_dim=128,
                             main_tasks=('rgb',)):
    H_img, W_img = input_info['image_size']
    N_H, N_W = H_img // patch_size, W_img // patch_size

    # adapt_tokens: slice+concat tokens of the main tasks (pure layout glue)
    parts = [encoder_tokens[:, input_info['tasks'][t]['start_idx']:
                               input_info['tasks'][t]['end_idx']] for t in main_tasks]
    x = jnp.concatenate(parts, axis=-1)                    # (B, n, in_channels)
    B, n, din = x.shape

    # proj_dec (M-tiled linear)
    x = linear_pallas(x.reshape(B * n, din), params['proj_w'], params['proj_b'])

    # 'b n (p c) -> b (n p) c' then 'b (nh nw ph pw) c -> b c (nh ph) (nw pw)',
    # kept as a flat lane-dense slab (B, C, Hf*Wf)
    C = embed_dim // preds_per_patch
    ph = pw = int(preds_per_patch ** 0.5)
    Hf, Wf = N_H * ph, N_W * pw
    x = x.reshape(B, N_H, N_W, ph, pw, C)
    x = x.transpose(0, 5, 1, 3, 2, 4).reshape(B, C, Hf * Wf)

    blocks = params['blocks']
    ncls = params['final_w'].shape[1]
    if len(blocks) == 0:
        logits = pointwise_conv_pallas(x, params['final_w'].T, params['final_b'])
    else:
        for blk in blocks[:-1]:
            x = fused_block_pallas(x, blk, Wf)             # (B, C, Hf*Wf)
        # last block has the final 1x1 conv fused in
        logits = fused_block_pallas(x, blocks[-1], Wf,
                                    final_w=params['final_w'],
                                    final_b=params['final_b'])  # (B, ncls, Hf*Wf)

    # bilinear upsample (align_corners=False) per (batch, class) plane
    logits = logits.reshape(B * ncls, Hf, Wf)
    up = bilinear_resize_pallas(logits, H_img, W_img)      # (B*ncls, H, W)
    return up.reshape(B, ncls, H_img, W_img)               # NCHW, like PyTorch


# ----------------------------------------------------------------------------
# Pure-JAX reference (for a sanity check)
# ----------------------------------------------------------------------------
def _ref_block(x, blk):
    B, H, W, C = x.shape
    xpad = jnp.pad(x, ((0, 0), (3, 3), (3, 3), (0, 0)))
    acc = jnp.zeros_like(x)
    for ki in range(7):
        for kj in range(7):
            acc = acc + xpad[:, ki:ki + H, kj:kj + W, :] * blk['dw_w'][ki, kj]
    y = acc + blk['dw_b']
    mean = y.mean(-1, keepdims=True)
    var = ((y - mean) ** 2).mean(-1, keepdims=True)
    y = (y - mean) / jnp.sqrt(var + 1e-6) * blk['ln_w'] + blk['ln_b']
    h = jax.nn.gelu(y @ blk['pw1_w'] + blk['pw1_b'], approximate=False)
    z = (h @ blk['pw2_w'] + blk['pw2_b']) * blk['gamma']
    return x + z


def ref_forward(encoder_tokens, input_info, params, *, patch_size, preds_per_patch,
                embed_dim, main_tasks):
    H, W = input_info['image_size']
    N_H, N_W = H // patch_size, W // patch_size
    parts = [encoder_tokens[:, input_info['tasks'][t]['start_idx']:
                               input_info['tasks'][t]['end_idx']] for t in main_tasks]
    x = jnp.concatenate(parts, axis=-1)
    B = x.shape[0]
    x = x @ params['proj_w'] + params['proj_b']
    C = embed_dim // preds_per_patch
    ph = pw = int(preds_per_patch ** 0.5)
    x = x.reshape(B, N_H, N_W, ph, pw, C).transpose(0, 1, 3, 2, 4, 5)
    x = x.reshape(B, N_H * ph, N_W * pw, C)
    for blk in params['blocks']:
        x = _ref_block(x, blk)
    x = x @ params['final_w'] + params['final_b']
    x = x.transpose(0, 3, 1, 2)
    wy = jnp.asarray(_interp_matrix(H, x.shape[2]))
    wx = jnp.asarray(_interp_matrix(W, x.shape[3]))
    return jnp.einsum('Hh,bchw,Ww->bcHW', wy, x, wx)


# ----------------------------------------------------------------------------
if __name__ == "__main__":
    # small, self-consistent config
    B = 2
    dim_tokens_enc = 32        # encoder token dim (init(dim_tokens_enc=...))
    embed_dim = 128
    preds_per_patch = 16       # class_dim = 128 / 16 = 8, ph = pw = 4
    num_classes = 3
    patch_size = 16
    depth = 2
    H_img = W_img = 32         # N_H = N_W = 2 -> 4 rgb tokens, feature map 8x8

    key = jax.random.PRNGKey(0)
    kp, kt = jax.random.split(key)
    params = init_params(kp, dim_tokens_enc, embed_dim, preds_per_patch,
                         num_classes, depth)

    n_rgb = (H_img // patch_size) * (W_img // patch_size)   # 4
    encoder_tokens = jax.random.normal(kt, (B, n_rgb + 2, dim_tokens_enc), jnp.float32)
    input_info = {
        'image_size': (H_img, W_img),
        'tasks': {'rgb': {'start_idx': 1, 'end_idx': 1 + n_rgb}},
    }

    out = convnext_adapter_forward(
        encoder_tokens, input_info, params,
        patch_size=patch_size, preds_per_patch=preds_per_patch,
        embed_dim=embed_dim, main_tasks=('rgb',))
    out = jax.block_until_ready(out)
    assert out.shape == (B, num_classes, H_img, W_img)

    ref = ref_forward(
        encoder_tokens, input_info, params,
        patch_size=patch_size, preds_per_patch=preds_per_patch,
        embed_dim=embed_dim, main_tasks=('rgb',))
    np.testing.assert_allclose(np.asarray(out), np.asarray(ref), rtol=2e-2, atol=2e-4)

    print("KERNEL_OK")
</pallas_src>

<mosaic_0001>
module attributes {stable_mosaic.version = 11 : i64} {
  func.func @_linear_kernel(%arg0: i32, %arg1: memref<8x32xf32, #tpu.memory_space<vmem>>, %arg2: memref<32x128xf32, #tpu.memory_space<vmem>>, %arg3: memref<1x128xf32, #tpu.memory_space<vmem>>, %arg4: memref<8x128xf32, #tpu.memory_space<vmem>>) attributes {dimension_semantics = [#tpu.dimension_semantics<parallel>], iteration_bounds = array<i64: 1>, scalar_prefetch = 0 : i64, scratch_operands = 0 : i64, tpu.core_type = #tpu.core_type<tc>, window_params = [{transform_indices = @transform_0, window_bounds = array<i64: 8, 32>}, {pipeline_mode = #tpu.pipeline_mode<synchronous>, transform_indices = @transform_1, window_bounds = array<i64: 32, 128>}, {pipeline_mode = #tpu.pipeline_mode<synchronous>, transform_indices = @transform_2, window_bounds = array<i64: 1, 128>}, {transform_indices = @transform_3, window_bounds = array<i64: 8, 128>}]} {
    %c0 = arith.constant 0 : index
    %c0_0 = arith.constant 0 : index
    %0 = vector.load %arg1[%c0, %c0_0] : memref<8x32xf32, #tpu.memory_space<vmem>>, vector<8x32xf32>
    %c0_1 = arith.constant 0 : index
    %c0_2 = arith.constant 0 : index
    %1 = vector.load %arg2[%c0_1, %c0_2] : memref<32x128xf32, #tpu.memory_space<vmem>>, vector<32x128xf32>
    %cst = arith.constant dense<0.000000e+00> : vector<8x128xf32>
    %2 = tpu.matmul %0, %1, %cst {dimension_numbers = #tpu.dot_dimension_numbers<[1], [0], [0], [1], [0, 0, 1, 1], [], []>} : vector<8x32xf32>, vector<32x128xf32>, vector<8x128xf32> -> vector<8x128xf32>
    %c0_3 = arith.constant 0 : index
    %c0_4 = arith.constant 0 : index
    %3 = vector.load %arg3[%c0_3, %c0_4] : memref<1x128xf32, #tpu.memory_space<vmem>>, vector<1x128xf32>
    %4 = vector.broadcast %3 : vector<1x128xf32> to vector<8x128xf32>
    %5 = arith.addf %2, %4 : vector<8x128xf32>
    %c0_5 = arith.constant 0 : index
    %c0_6 = arith.constant 0 : index
    %6 = vector.load %arg4[%c0_5, %c0_6] : memref<8x128xf32, #tpu.memory_space<vmem>>, vector<8x128xf32>
    tpu.vector_store %arg4[%c0_5, %c0_6], %5 {strides = array<i32>} : memref<8x128xf32, #tpu.memory_space<vmem>>, vector<8x128xf32>,
    return
  }
  func.func @transform_0(%arg0: i32) -> (i32, i32) {
    %c0_i32 = arith.constant 0 : i32
    %c0_i32_0 = arith.constant 0 : i32
    return %arg0, %c0_i32 : i32, i32
  }
  func.func @transform_1(%arg0: i32) -> (i32, i32) {
    %c0_i32 = arith.constant 0 : i32
    %c0_i32_0 = arith.constant 0 : i32
    %c0_i32_1 = arith.constant 0 : i32
    return %c0_i32, %c0_i32_0 : i32, i32
  }
  func.func @transform_2(%arg0: i32) -> (i32, i32) {
    %c0_i32 = arith.constant 0 : i32
    %c0_i32_0 = arith.constant 0 : i32
    %c0_i32_1 = arith.constant 0 : i32
    return %c0_i32, %c0_i32_0 : i32, i32
  }
  func.func @transform_3(%arg0: i32) -> (i32, i32) {
    %c0_i32 = arith.constant 0 : i32
    %c0_i32_0 = arith.constant 0 : i32
    return %arg0, %c0_i32 : i32, i32
  }
}

</mosaic_0001>

<llo_original>
// kernel: tpu_custom_call.1
$region0: #{tpu_custom_call.1}
  #allocation0 [shape = 'u32[]', space=smem, size = 0x4, offset = 0x4, fixed_abs, tag = 'smem constant byte address 0x4 - core index']
  #allocation1 [shape = 'u32[144,128]{1,0:T(1,128)}', space=vmem, size = 0x12000, scoped, tag = 'internal scratch']
  %s0 = inlined_call_operand.hbm [shape: f32[8,32], index: 0, kind: input, shape index: {}]
  %s1 = inlined_call_operand.hbm [shape: f32[32,128], index: 1, kind: input, shape index: {}]
  %s2 = inlined_call_operand.vmem [shape: f32[1,128], index: 2, kind: input, shape index: {}]
  %s3 = inlined_call_operand.hbm [shape: f32[8,128], index: 3, kind: output, shape index: {}]
  %s4 = sld [smem:[#allocation0]]
  $region30: #{tpu_custom_call.1} parent=0
    _
  %s6 = ssub.s32 1, %s4
  %s7 = scalar_select 0, %s6, %s4
  $region1: #{tpu_custom_call.1} parent=0
    #allocation2 [shape = 'u8[4096]{0}', space=vmem, size = 0x1000, scoped, tag = 'input window, operand 0, single buffered']
    #allocation3 [shape = 's32[1]{0}', space=sflag, size = 0x4, scoped, tag = 'scoped memory for tpu_custom_call.1']
    #allocation4 [shape = 's32[1]{0}', space=sflag, size = 0x4, scoped, tag = 'scoped memory for tpu_custom_call.1']
    #allocation5 [shape = 'u8[16384]{0}', space=vmem, size = 0x4000, scoped, tag = 'input window, operand 1, single buffered']
    #allocation6 [shape = 's32[1]{0}', space=sflag, size = 0x4, scoped, tag = 'scoped memory for tpu_custom_call.1']
    #allocation7 [shape = 'u8[4096]{0}', space=vmem, size = 0x1000, scoped, tag = 'output window, operand 0, single buffered']
    %8 = vsyncpa [#allocation3], 0
    %9 = vsyncpa [#allocation6], 0
    %10 = vsyncpa [#allocation4], 0
    // Predicated region
    $region2: #{tpu_custom_call.1} parent=1 // pred_check
      _
    $region3: #{tpu_custom_call.1} parent=1 // pred_check_branch
      %12 = sbr.rel (0) target = $region5
    $region4: #{tpu_custom_call.1} parent=1 // pred_region
      %s14 = ssub.s32 128, 128
      %15 = vsyncadd [#allocation3], %s14
      %s17 = sshll.u32 [#allocation2], 4
      %s18 = int_to_ptr.vmem [resolvable:$true] %s17
      %20 = dma.hbm_to_vmem [thread:$0]  %s0, 128, %s18, [#allocation3]
    $region5: #{tpu_custom_call.1} parent=1 // pred_fallthru
      _
    // Predicated region
    $region6: #{tpu_custom_call.1} parent=1 // pred_check
      _
    $region7: #{tpu_custom_call.1} parent=1 // pred_check_branch
      %22 = sbr.rel (0) target = $region9
    $region8: #{tpu_custom_call.1} parent=1 // pred_region
      %s24 = ssub.s32 512, 512
      %25 = vsyncadd [#allocation6], %s24
      %s26 = sshll.u32 [#allocation5], 4
      %s27 = int_to_ptr.vmem [resolvable:$true] %s26
      %32 = dma.hbm_to_vmem [thread:$0]  %s1, 512, %s27, [#allocation6], 128, 128, 8
    $region9: #{tpu_custom_call.1} parent=1 // pred_fallthru
      _
    // Predicated region
    $region10: #{tpu_custom_call.1} parent=1 // pred_check
      _
    $region11: #{tpu_custom_call.1} parent=1 // pred_check_branch
      %34 = sbr.rel (0) target = $region13
    $region12: #{tpu_custom_call.1} parent=1 // pred_region
      _
    $region13: #{tpu_custom_call.1} parent=1 // pred_fallthru
      _
    // Predicated region
    $region14: #{tpu_custom_call.1} parent=1 // pred_check
      _
    $region15: #{tpu_custom_call.1} parent=1 // pred_check_branch
      %36 = sbr.rel (0) target = $region17
    $region16: #{tpu_custom_call.1} parent=1 // pred_region
      %37 = dma.done [#allocation3], 128
    $region17: #{tpu_custom_call.1} parent=1 // pred_fallthru
      _
    // Predicated region
    $region18: #{tpu_custom_call.1} parent=1 // pred_check
      _
    $region19: #{tpu_custom_call.1} parent=1 // pred_check_branch
      %39 = sbr.rel (0) target = $region21
    $region20: #{tpu_custom_call.1} parent=1 // pred_region
      %40 = dma.done [#allocation6], 512
    $region21: #{tpu_custom_call.1} parent=1 // pred_fallthru
      _
    %v41 = vld [vmem:[#allocation2] sm:$0xff]
    %v42 = vld [vmem:[#allocation5] sm:$0xff]
    %v43 = vld [vmem:[#allocation5 + $0x8] sm:$0xff]
    %v44 = vld [vmem:[#allocation5 + $0x10] sm:$0xff]
    %v45 = vld [vmem:[#allocation5 + $0x18] sm:$0xff]
    %v46 = vld [vmem:[%s2] sm:$0x1]
    %v48 = vlaneseq
    %v49 = vshrl.u32 %v48, 7
    %v50 = vsub.s32 0, %v49
    %v51 = vrot.slane %v46, %v50
    %vm53 = vcmask 261120
    %v55 = vsel %vm53, %v41, 0
    %57 = vmatprep.subr.mxu0 0.0
    %58 = vmatpush1.msra.mxu0 %v42
    %59 = vmatprep.subr.mxu0 0.0
    %60 = vmatpush1.msra.mxu0 %v43
    %61 = vmatprep.subr.mxu0 0.0
    %62 = vmatpush1.msra.mxu0 %v44
    %63 = vmatprep.subr.mxu0 0.0
    %64 = vmatpush1.msra.mxu0 %v45
    %65 = vmatprep.subr.mxu0 0.0
    %66 = vmatpush1.msra.mxu0 0.0
    %67 = vmatprep.subr.mxu0 0.0
    %68 = vmatpush1.msra.mxu0 0.0
    %69 = vmatprep.subr.mxu0 0.0
    %70 = vmatpush1.msra.mxu0 0.0
    %71 = vmatprep.subr.mxu0 0.0
    %72 = vmatpush1.msra.mxu0 0.0
    %73 = vmatprep.subr.mxu0 0.0
    %74 = vmatpush1.msra.mxu0 0.0
    %75 = vmatprep.subr.mxu0 0.0
    %76 = vmatpush1.msra.mxu0 0.0
    %77 = vmatprep.subr.mxu0 0.0
    %78 = vmatpush1.msra.mxu0 0.0
    %79 = vmatprep.subr.mxu0 0.0
    %80 = vmatpush1.msra.mxu0 0.0
    %81 = vmatprep.subr.mxu0 0.0
    %82 = vmatpush1.msra.mxu0 0.0
    %83 = vmatprep.subr.mxu0 0.0
    %84 = vmatpush1.msra.mxu0 0.0
    %85 = vmatprep.subr.mxu0 0.0
    %86 = vmatpush1.msra.mxu0 0.0
    %87 = vmatprep.subr.mxu0 0.0
    %88 = vmatpush1.msra.mxu0 0.0
    %89 = vmatprep.subr.mxu0 0.0
    %90 = vmatpush1.msra.mxu0 0.0
    %91 = vmatprep.subr.mxu0 0.0
    %92 = vmatpush1.msra.mxu0 0.0
    %93 = vmatprep.subr.mxu0 0.0
    %94 = vmatpush1.msra.mxu0 0.0
    %95 = vmatprep.subr.mxu0 0.0
    %96 = vmatpush1.msra.mxu0 0.0
    %97 = vmatprep.subr.mxu0 0.0
    %98 = vmatpush1.msra.mxu0 0.0
    %99 = vmatprep.subr.mxu0 0.0
    %100 = vmatpush1.msra.mxu0 0.0
    %101 = vmatprep.subr.mxu0 0.0
    %102 = vmatpush1.msra.mxu0 0.0
    %103 = vmatprep.subr.mxu0 0.0
    %104 = vmatpush1.msra.mxu0 0.0
    %105 = vmatprep.subr.mxu0 0.0
    %106 = vmatpush1.msra.mxu0 0.0
    %107 = vmatprep.subr.mxu0 0.0
    %108 = vmatpush1.msra.mxu0 0.0
    %109 = vmatprep.subr.mxu0 0.0
    %110 = vmatpush1.msra.mxu0 0.0
    %111 = vmatprep.subr.mxu0 0.0
    %112 = vmatpush1.msra.mxu0 0.0
    %113 = vmatprep.subr.mxu0 0.0
    %114 = vmatpush1.msra.mxu0 0.0
    %115 = vmatprep.subr.mxu0 0.0
    %116 = vmatpush1.msra.mxu0 0.0
    %117 = vmatprep.subr.mxu0 0.0
    %118 = vmatpush1.msra.mxu0 0.0
    %119 = vmatprep.subr.mxu0 0.0
    %120 = vmatpush1.msra.mxu0 0.0
    %121 = vmatprep.mubr.f32.mxu0 0.0
    %122 = vmatmul.mubr.f32.gmra.mrb[0].mxu0 %v55
    %v123 = vpop.f32.mrb[0].mxu0
    %v124 = vadd.f32 %v51, %v123
    %v125 = vpop.f32.mrb[0].mxu0
    %126 = vdwg.mxu0
    %127 = vst [vmem:[#allocation7] sm:$0xff] %v124
    // Predicated region
    $region22: #{tpu_custom_call.1} parent=1 // pred_check
      _
    $region23: #{tpu_custom_call.1} parent=1 // pred_check_branch
      %129 = sbr.rel (0) target = $region25
    $region24: #{tpu_custom_call.1} parent=1 // pred_region
      %s131 = ssub.s32 128, 128
      %132 = vsyncadd [#allocation4], %s131
      %s134 = sshll.u32 [#allocation7], 4
      %s135 = int_to_ptr.vmem [resolvable:$true] %s134
      %137 = dma.vmem_to_hbm [thread:$0]  %s135, 128, %s3, [#allocation4]
    $region25: #{tpu_custom_call.1} parent=1 // pred_fallthru
      _
    // Predicated region
    $region26: #{tpu_custom_call.1} parent=1 // pred_check
      _
    $region27: #{tpu_custom_call.1} parent=1 // pred_check_branch
      %139 = sbr.rel (0) target = $region29
    $region28: #{tpu_custom_call.1} parent=1 // pred_region
      %140 = dma.done [#allocation4], 128
    $region29: #{tpu_custom_call.1} parent=1 // pred_fallthru
      _
    %141 = vsyncpa [#allocation3], 1
    %142 = vsyncpa [#allocation6], 1
    %143 = vsyncpa [#allocation4], 1

</llo_original>
